<compile_context>
chip_gen: v7x
topology: tpu7x:2x2x1
jax: 0.10.0
libtpu: 0.0.40
codegen_flags: <defaults>
</compile_context>

<pallas_src>
import jax
import jax.numpy as jnp
from jax.experimental import pallas as pl
from jax.experimental.pallas import tpu as pltpu


def _transition_kernel(x_ref, scale_ref, bias_ref, w_ref, o_ref):
    # x_ref:     (SLAB, W, Cin)            bf16   (batch dim squeezed by BlockSpec)
    # scale_ref: (1, Cin)                  f32    folded BN scale = gamma/sqrt(var+eps)
    # bias_ref:  (1, Cin)                  f32    folded BN bias  = beta - mean*scale
    # w_ref:     (Cin, Cout_pad)           bf16   1x1 conv weight (transposed, padded)
    # o_ref:     (SLAB//2, W//2, Cout_pad) f32
    slab, w, cin = x_ref.shape
    cout_p = w_ref.shape[1]

    # Folded BatchNorm + ReLU -- pure VPU elementwise (f32 math on bf16 input).
    x = x_ref[...].astype(jnp.float32)
    scale = scale_ref[...].reshape(1, 1, cin)
    bias = bias_ref[...].reshape(1, 1, cin)
    y = jnp.maximum(x * scale + bias, 0.0)                     # (SLAB, W, Cin)

    # 2x2 / stride-2 average pool BEFORE the 1x1 conv (they commute).
    # H direction: pair adjacent rows -- splits a non-layout dim, pure VPU adds.
    yh = y.reshape(slab // 2, 2, w, cin)
    yh = yh[:, 0] + yh[:, 1]                                   # (SLAB/2, W, Cin)
    # W direction: reshape to (.., W/2, 2, Cin) and add the pair -- the lane
    # (channel) axis is untouched, avoiding sublane-strided slicing.
    yw = yh.reshape(slab // 2, w // 2, 2, cin)
    pooled = (yw[:, :, 0, :] + yw[:, :, 1, :]) * 0.25          # (SLAB/2, W/2, Cin)

    # 1x1 conv == channel matmul on the MXU: bf16 operands, f32 accumulation.
    m = (slab // 2) * (w // 2)
    z = jnp.dot(pooled.reshape(m, cin).astype(jnp.bfloat16), w_ref[...],
                preferred_element_type=jnp.float32)            # (m, Cout_pad)
    o_ref[...] = z.reshape(slab // 2, w // 2, cout_p)


def _pick_slab(h, w, cin, bytes_per_elem=2, target_bytes=2 << 20):
    """Largest even divisor of h whose input slab (slab*W*Cin) fits ~target_bytes.

    ~2 MiB per input buffer keeps (2x double-buffered input + 2x output +
    resident weight) comfortably inside v7x's 64 MiB VMEM while still being
    large enough to amortize the ~0.35 us per-grid-step overhead.
    """
    best = 2
    for s in range(2, h + 1, 2):
        if h % s == 0 and s * w * cin * bytes_per_elem <= target_bytes:
            best = s
    return best


def transition_layer(x_nchw, gamma, beta, conv_w, eps=1e-5):
    """x_nchw: (N, Cin, H, W) f32; conv_w: (Cout, Cin, 1, 1).
    Returns (N, Cout, H//2, W//2) f32 matching the PyTorch module (train-mode BN)."""
    n, cin, h, w = x_nchw.shape
    cout = conv_w.shape[0]
    assert h % 2 == 0 and w % 2 == 0, "AvgPool2d(2) path assumes even H and W"

    x_nchw = x_nchw.astype(jnp.float32)

    # Train-mode BN statistics in ONE fused HBM pass (sum + sumsq), folded into
    # a per-channel affine. (Biased variance == PyTorch's normalization path.)
    cnt = n * h * w
    s1 = jnp.sum(x_nchw, axis=(0, 2, 3))
    s2 = jnp.sum(x_nchw * x_nchw, axis=(0, 2, 3))
    mean = s1 / cnt
    var = s2 / cnt - mean * mean
    scale = gamma.astype(jnp.float32) / jnp.sqrt(var + eps)    # (Cin,)
    bias = beta.astype(jnp.float32) - mean * scale             # (Cin,)

    # NHWC (channels -> lane axis) and bf16 to halve the kernel's HBM read.
    # TODO(synk): keep NHWC end-to-end across DenseNet layers to drop both transposes.
    x_nhwc = jnp.transpose(x_nchw, (0, 2, 3, 1)).astype(jnp.bfloat16)

    # Lane-dense output: pad Cout up to a multiple of 128 (unmasked stores).
    cout_p = ((cout + 127) // 128) * 128
    w2 = conv_w[:, :, 0, 0].T.astype(jnp.bfloat16)             # (Cin, Cout)
    w2 = jnp.pad(w2, ((0, 0), (0, cout_p - cout)))             # (Cin, Cout_pad)

    slab = _pick_slab(h, w, cin)                               # even, divides h
    grid = (n, h // slab)

    out_nhwc = pl.pallas_call(
        _transition_kernel,
        out_shape=jax.ShapeDtypeStruct((n, h // 2, w // 2, cout_p), jnp.float32),
        grid_spec=pltpu.PrefetchScalarGridSpec(
            num_scalar_prefetch=0,
            grid=grid,
            in_specs=[
                # x: one image, one row slab per grid step (batch dim squeezed).
                pl.BlockSpec((None, slab, w, cin), lambda b, r: (b, r, 0, 0)),
                # scale / bias / weight: resident across the whole grid.
                pl.BlockSpec((1, cin), lambda b, r: (0, 0)),
                pl.BlockSpec((1, cin), lambda b, r: (0, 0)),
                pl.BlockSpec((cin, cout_p), lambda b, r: (0, 0)),
            ],
            out_specs=pl.BlockSpec((None, slab // 2, w // 2, cout_p),
                                   lambda b, r: (b, r, 0, 0)),
        ),
        compiler_params=pltpu.CompilerParams(
            # Both grid axes are independent -> shard across v7x's 2 TensorCores.
            dimension_semantics=("parallel", "parallel"),
            # Above the v5e/v6e scoped defaults, below v7x's 64 MiB physical.
            vmem_limit_bytes=48 * 1024 * 1024,
        ),
    )(x_nhwc, scale.reshape(1, cin), bias.reshape(1, cin), w2)

    out_nhwc = out_nhwc[..., :cout]                            # drop lane padding
    return jnp.transpose(out_nhwc, (0, 3, 1, 2))               # back to NCHW


def _reference(x_nchw, gamma, beta, conv_w, eps=1e-5):
    """Pure-JAX f32 reference of the PyTorch forward (train-mode BN)."""
    mean = jnp.mean(x_nchw, axis=(0, 2, 3), keepdims=True)
    var = jnp.mean((x_nchw - mean) ** 2, axis=(0, 2, 3), keepdims=True)
    xn = (x_nchw - mean) / jnp.sqrt(var + eps)
    xn = xn * gamma[None, :, None, None] + beta[None, :, None, None]
    y = jnp.maximum(xn, 0.0)
    z = jnp.einsum('nchw,oc->nohw', y, conv_w[:, :, 0, 0])     # 1x1 conv
    n, c, h, w = z.shape
    return z.reshape(n, c, h // 2, 2, w // 2, 2).mean(axis=(3, 5))


if __name__ == "__main__":
    key = jax.random.PRNGKey(0)
    kx, kw = jax.random.split(key)

    N, Cin, Cout, H, W = 2, 8, 4, 16, 16
    x = jax.random.normal(kx, (N, Cin, H, W), dtype=jnp.float32)

    # Deterministic parameter init (BatchNorm2d default: gamma=1, beta=0).
    gamma = jnp.ones((Cin,), dtype=jnp.float32)
    beta = jnp.zeros((Cin,), dtype=jnp.float32)
    conv_w = 0.1 * jax.random.normal(kw, (Cout, Cin, 1, 1), dtype=jnp.float32)

    out = transition_layer(x, gamma, beta, conv_w)
    out = jax.block_until_ready(out)

    ref = _reference(x, gamma, beta, conv_w)
    assert out.shape == (N, Cout, H // 2, W // 2), out.shape
    # bf16 activations/weights in the kernel -> loosened tolerance vs f32 ref.
    assert jnp.allclose(out, ref, atol=2e-2, rtol=2e-2), "mismatch vs reference"

    print("KERNEL_OK")
</pallas_src>

<mosaic_0001>
module attributes {stable_mosaic.version = 11 : i64} {
  func.func @_transition_kernel(%arg0: i32, %arg1: i32, %arg2: memref<1x16x16x8xbf16, #tpu.memory_space<vmem>>, %arg3: memref<1x8xf32, #tpu.memory_space<vmem>>, %arg4: memref<1x8xf32, #tpu.memory_space<vmem>>, %arg5: memref<8x128xbf16, #tpu.memory_space<vmem>>, %arg6: memref<1x8x8x128xf32, #tpu.memory_space<vmem>>) attributes {dimension_semantics = [#tpu.dimension_semantics<parallel>, #tpu.dimension_semantics<parallel>], iteration_bounds = array<i64: 2, 1>, scalar_prefetch = 0 : i64, scratch_operands = 0 : i64, tpu.core_type = #tpu.core_type<tc>, window_params = [{transform_indices = @transform_0, window_bounds = array<i64: 1, 16, 16, 8>}, {pipeline_mode = #tpu.pipeline_mode<synchronous>, transform_indices = @transform_1, window_bounds = array<i64: 1, 8>}, {pipeline_mode = #tpu.pipeline_mode<synchronous>, transform_indices = @transform_2, window_bounds = array<i64: 1, 8>}, {pipeline_mode = #tpu.pipeline_mode<synchronous>, transform_indices = @transform_3, window_bounds = array<i64: 8, 128>}, {transform_indices = @transform_4, window_bounds = array<i64: 1, 8, 8, 128>}]} {
    %c0 = arith.constant 0 : index
    %c0_0 = arith.constant 0 : index
    %c0_1 = arith.constant 0 : index
    %c0_2 = arith.constant 0 : index
    %0 = vector.load %arg2[%c0, %c0_0, %c0_1, %c0_2] : memref<1x16x16x8xbf16, #tpu.memory_space<vmem>>, vector<1x16x16x8xbf16>
    %1 = vector.shape_cast %0 : vector<1x16x16x8xbf16> to vector<16x16x8xbf16>
    %2 = arith.extf %1 : vector<16x16x8xbf16> to vector<16x16x8xf32>
    %c0_3 = arith.constant 0 : index
    %c0_4 = arith.constant 0 : index
    %3 = vector.load %arg3[%c0_3, %c0_4] : memref<1x8xf32, #tpu.memory_space<vmem>>, vector<1x8xf32>
    %4 = vector.shape_cast %3 : vector<1x8xf32> to vector<1x1x8xf32>
    %c0_5 = arith.constant 0 : index
    %c0_6 = arith.constant 0 : index
    %5 = vector.load %arg4[%c0_5, %c0_6] : memref<1x8xf32, #tpu.memory_space<vmem>>, vector<1x8xf32>
    %6 = vector.shape_cast %5 : vector<1x8xf32> to vector<1x1x8xf32>
    %7 = vector.broadcast %4 : vector<1x1x8xf32> to vector<16x16x8xf32>
    %8 = arith.mulf %2, %7 : vector<16x16x8xf32>
    %9 = vector.broadcast %6 : vector<1x1x8xf32> to vector<16x16x8xf32>
    %10 = arith.addf %8, %9 : vector<16x16x8xf32>
    %cst = arith.constant 0.000000e+00 : f32
    %11 = vector.broadcast %cst : f32 to vector<16x16x8xf32>
    %12 = arith.maximumf %10, %11 : vector<16x16x8xf32>
    %13 = vector.shape_cast %12 : vector<16x16x8xf32> to vector<8x2x16x8xf32>
    %14 = vector.extract_strided_slice %13 {offsets = [0, 0, 0, 0], sizes = [8, 1, 16, 8], strides = [1, 1, 1, 1]} : vector<8x2x16x8xf32> to vector<8x1x16x8xf32>
    %15 = vector.shape_cast %14 : vector<8x1x16x8xf32> to vector<8x16x8xf32>
    %16 = vector.extract_strided_slice %13 {offsets = [0, 1, 0, 0], sizes = [8, 1, 16, 8], strides = [1, 1, 1, 1]} : vector<8x2x16x8xf32> to vector<8x1x16x8xf32>
    %17 = vector.shape_cast %16 : vector<8x1x16x8xf32> to vector<8x16x8xf32>
    %18 = arith.addf %15, %17 : vector<8x16x8xf32>
    %19 = vector.shape_cast %18 : vector<8x16x8xf32> to vector<8x8x2x8xf32>
    %20 = vector.extract_strided_slice %19 {offsets = [0, 0, 0, 0], sizes = [8, 8, 1, 8], strides = [1, 1, 1, 1]} : vector<8x8x2x8xf32> to vector<8x8x1x8xf32>
    %21 = vector.shape_cast %20 : vector<8x8x1x8xf32> to vector<8x8x8xf32>
    %22 = vector.extract_strided_slice %19 {offsets = [0, 0, 1, 0], sizes = [8, 8, 1, 8], strides = [1, 1, 1, 1]} : vector<8x8x2x8xf32> to vector<8x8x1x8xf32>
    %23 = vector.shape_cast %22 : vector<8x8x1x8xf32> to vector<8x8x8xf32>
    %24 = arith.addf %21, %23 : vector<8x8x8xf32>
    %cst_7 = arith.constant 2.500000e-01 : f32
    %25 = vector.broadcast %cst_7 : f32 to vector<8x8x8xf32>
    %26 = arith.mulf %24, %25 : vector<8x8x8xf32>
    %27 = vector.shape_cast %26 : vector<8x8x8xf32> to vector<64x8xf32>
    %28 = arith.truncf %27 : vector<64x8xf32> to vector<64x8xbf16>
    %c0_8 = arith.constant 0 : index
    %c0_9 = arith.constant 0 : index
    %29 = vector.load %arg5[%c0_8, %c0_9] : memref<8x128xbf16, #tpu.memory_space<vmem>>, vector<8x128xbf16>
    %cst_10 = arith.constant dense<0.000000e+00> : vector<64x128xf32>
    %30 = tpu.matmul %28, %29, %cst_10 {dimension_numbers = #tpu.dot_dimension_numbers<[1], [0], [0], [1], [0, 0, 1, 1], [], []>} : vector<64x8xbf16>, vector<8x128xbf16>, vector<64x128xf32> -> vector<64x128xf32>
    %31 = vector.shape_cast %30 : vector<64x128xf32> to vector<8x8x128xf32>
    %c0_11 = arith.constant 0 : index
    %c0_12 = arith.constant 0 : index
    %c0_13 = arith.constant 0 : index
    %c0_14 = arith.constant 0 : index
    %32 = vector.load %arg6[%c0_11, %c0_12, %c0_13, %c0_14] : memref<1x8x8x128xf32, #tpu.memory_space<vmem>>, vector<1x8x8x128xf32>
    %33 = vector.shape_cast %32 : vector<1x8x8x128xf32> to vector<8x8x128xf32>
    %34 = vector.shape_cast %31 : vector<8x8x128xf32> to vector<1x8x8x128xf32>
    tpu.vector_store %arg6[%c0_11, %c0_12, %c0_13, %c0_14], %34 {strides = array<i32>} : memref<1x8x8x128xf32, #tpu.memory_space<vmem>>, vector<1x8x8x128xf32>,
    return
  }
  func.func @transform_0(%arg0: i32, %arg1: i32) -> (i32, i32, i32, i32) {
    %c0_i32 = arith.constant 0 : i32
    %c0_i32_0 = arith.constant 0 : i32
    %c0_i32_1 = arith.constant 0 : i32
    return %arg0, %arg1, %c0_i32, %c0_i32_0 : i32, i32, i32, i32
  }
  func.func @transform_1(%arg0: i32, %arg1: i32) -> (i32, i32) {
    %c0_i32 = arith.constant 0 : i32
    %c0_i32_0 = arith.constant 0 : i32
    %c0_i32_1 = arith.constant 0 : i32
    return %c0_i32, %c0_i32_0 : i32, i32
  }
  func.func @transform_2(%arg0: i32, %arg1: i32) -> (i32, i32) {
    %c0_i32 = arith.constant 0 : i32
    %c0_i32_0 = arith.constant 0 : i32
    %c0_i32_1 = arith.constant 0 : i32
    return %c0_i32, %c0_i32_0 : i32, i32
  }
  func.func @transform_3(%arg0: i32, %arg1: i32) -> (i32, i32) {
    %c0_i32 = arith.constant 0 : i32
    %c0_i32_0 = arith.constant 0 : i32
    %c0_i32_1 = arith.constant 0 : i32
    return %c0_i32, %c0_i32_0 : i32, i32
  }
  func.func @transform_4(%arg0: i32, %arg1: i32) -> (i32, i32, i32, i32) {
    %c0_i32 = arith.constant 0 : i32
    %c0_i32_0 = arith.constant 0 : i32
    %c0_i32_1 = arith.constant 0 : i32
    return %arg0, %arg1, %c0_i32, %c0_i32_0 : i32, i32, i32, i32
  }
}

</mosaic_0001>

<llo_original>
// kernel: tpu_custom_call.1
$region0: #{tpu_custom_call.1}
  #allocation0 [shape = 'u32[]', space=smem, size = 0x4, offset = 0x4, fixed_abs, tag = 'smem constant byte address 0x4 - core index']
  #allocation1 [shape = 'u32[144,128]{1,0:T(1,128)}', space=vmem, size = 0x12000, scoped, tag = 'internal scratch']
  %s0 = inlined_call_operand.vmem [shape: bf16[2,16,16,8], index: 0, kind: input, shape index: {}]
  %s1 = inlined_call_operand.vmem [shape: f32[1,8], index: 1, kind: input, shape index: {}]
  %s2 = inlined_call_operand.vmem [shape: f32[1,8], index: 2, kind: input, shape index: {}]
  %s3 = inlined_call_operand.vmem [shape: bf16[8,128], index: 3, kind: input, shape index: {}]
  %s4 = inlined_call_operand.hbm [shape: f32[2,8,8,128], index: 4, kind: output, shape index: {}]
  %s5 = sld [smem:[#allocation0]]
  $region49: #{tpu_custom_call.1} parent=0
    _
  %s7 = ssub.s32 1, %s5
  %s8 = scalar_select 0, %s7, %s5
  $region1: #{tpu_custom_call.1} parent=0
    #allocation2 [shape = 'u8[65536]{0}', space=vmem, size = 0x10000, scoped, tag = 'output window, operand 0']
    #allocation3 [shape = 's32[2]{0}', space=sflag, size = 0x8, scoped, tag = 'scoped memory for tpu_custom_call.1']
    %9 = vsyncpa [#allocation3], 0
    %s10 = scalar_lea.sflag [#allocation3], 1
    %11 = vsyncpa %s10, 0
    loop: start=0, step=1, limit=4
    $region2: #{tpu_custom_call.1} parent=1 // loop_pre_header
      _
    $region3: #{tpu_custom_call.1} parent=1 // loop_header
      %s13 = sphi 0, %s17
      %p14 = scmp.ge.s32.totalorder %s13, 4
      %s20 = sphi 0, %s32
      %s21 = sphi 0, %s28
      %s22 = sphi 0, %s20
      %s23 = sphi 0, %s21
      %s24 = sphi 0, %s22
      %s25 = sphi 0, %s23
      %s37 = sphi 0, %s39
      %s40 = sphi 0, %s37
      %s41 = sphi 0, %s40
      %s57 = sphi 0, %s41
      %s61 = sphi 0, %s61
      %s63 = sphi 0, %s61
      %s64 = sphi 0, %s63
      %s78 = sphi 0, %s64
      %s82 = sphi 0, %s82
      %s84 = sphi 0, %s82
      %s85 = sphi 0, %s84
      %s99 = sphi 0, %s85
      %s103 = sphi 0, %s103
      %s105 = sphi 0, %s103
      %s106 = sphi 0, %s105
      %s120 = sphi 0, %s106
      %s128 = sphi 0, %s130
      %s131 = sphi 0, %s128
      %s132 = sphi 0, %s131
      %s148 = sphi 0, %s132
    $region4: #{tpu_custom_call.1} parent=1 // loop_header_branch
      %16 = sbr.rel (%p14) target = $region8
    $region5: #{tpu_custom_call.1} parent=1 // loop_body
      %s18 = ssub.s32 %s13, 1
      %s19 = ssub.s32 %s13, 2
      %s26 = sadd.s32 1, %s21
      %p27 = scmp.ge.s32.totalorder %s26, 1
      %s28 = scalar_select %p27, 0, %s26
      %s29 = sadd.s32 1, %s20
      %s30 = scalar_select %p27, %s29, %s20
      %p31 = scmp.ge.s32.totalorder %s30, 2
      %s32 = scalar_select %p31, 0, %s30
      %s33 = ssub.s32 %s20, %s32
      %s34 = ssub.s32 %s21, %s28
      %s35 = sor.u32 %s33, %s34
      %p36 = scmp.eq.s32.totalorder %s35, 0
      %s38 = sadd.s32 %s37, 1
      %s39 = scalar_select %p36, %s37, %s38
      %p42 = pneg %p36
      %p43 = scmp.eq.s32.totalorder %s13, 1
      %p44 = por %p42, %p43
      %p45 = scmp.ne.s32.totalorder %s37, %s40
      %p46 = scmp.eq.s32.totalorder %s13, 0
      %p47 = por %p45, %p46
      %p48 = scmp.ne.s32.totalorder %s37, %s40
      %p49 = scmp.eq.s32.totalorder %s18, 1
      %p50 = por %p48, %p49
      %p51 = scmp.ne.s32.totalorder %s40, %s41
      %p52 = scmp.eq.s32.totalorder %s18, 0
      %p53 = por %p51, %p52
      %p54 = scmp.ne.s32.totalorder %s40, %s41
      %p55 = scmp.eq.s32.totalorder %s19, 1
      %p56 = por %p54, %p55
      %p58 = scmp.ne.s32.totalorder %s41, %s57
      %p59 = scmp.eq.s32.totalorder %s19, 0
      %p60 = por %p58, %p59
      %s62 = sadd.s32 %s61, 1
      %p65 = scmp.eq.s32.totalorder %s13, 1
      %p66 = scmp.ne.s32.totalorder %s61, %s63
      %p67 = scmp.eq.s32.totalorder %s13, 0
      %p68 = por %p66, %p67
      %p69 = scmp.ne.s32.totalorder %s61, %s63
      %p70 = scmp.eq.s32.totalorder %s18, 1
      %p71 = por %p69, %p70
      %p72 = scmp.ne.s32.totalorder %s63, %s64
      %p73 = scmp.eq.s32.totalorder %s18, 0
      %p74 = por %p72, %p73
      %p75 = scmp.ne.s32.totalorder %s63, %s64
      %p76 = scmp.eq.s32.totalorder %s19, 1
      %p77 = por %p75, %p76
      %p79 = scmp.ne.s32.totalorder %s64, %s78
      %p80 = scmp.eq.s32.totalorder %s19, 0
      %p81 = por %p79, %p80
      %s83 = sadd.s32 %s82, 1
      %p86 = scmp.eq.s32.totalorder %s13, 1
      %p87 = scmp.ne.s32.totalorder %s82, %s84
      %p88 = scmp.eq.s32.totalorder %s13, 0
      %p89 = por %p87, %p88
      %p90 = scmp.ne.s32.totalorder %s82, %s84
      %p91 = scmp.eq.s32.totalorder %s18, 1
      %p92 = por %p90, %p91
      %p93 = scmp.ne.s32.totalorder %s84, %s85
      %p94 = scmp.eq.s32.totalorder %s18, 0
      %p95 = por %p93, %p94
      %p96 = scmp.ne.s32.totalorder %s84, %s85
      %p97 = scmp.eq.s32.totalorder %s19, 1
      %p98 = por %p96, %p97
      %p100 = scmp.ne.s32.totalorder %s85, %s99
      %p101 = scmp.eq.s32.totalorder %s19, 0
      %p102 = por %p100, %p101
      %s104 = sadd.s32 %s103, 1
      %p107 = scmp.eq.s32.totalorder %s13, 1
      %p108 = scmp.ne.s32.totalorder %s103, %s105
      %p109 = scmp.eq.s32.totalorder %s13, 0
      %p110 = por %p108, %p109
      %p111 = scmp.ne.s32.totalorder %s103, %s105
      %p112 = scmp.eq.s32.totalorder %s18, 1
      %p113 = por %p111, %p112
      %p114 = scmp.ne.s32.totalorder %s105, %s106
      %p115 = scmp.eq.s32.totalorder %s18, 0
      %p116 = por %p114, %p115
      %p117 = scmp.ne.s32.totalorder %s105, %s106
      %p118 = scmp.eq.s32.totalorder %s19, 1
      %p119 = por %p117, %p118
      %p121 = scmp.ne.s32.totalorder %s106, %s120
      %p122 = scmp.eq.s32.totalorder %s19, 0
      %p123 = por %p121, %p122
      %s124 = ssub.s32 %s20, %s32
      %s125 = ssub.s32 %s21, %s28
      %s126 = sor.u32 %s124, %s125
      %p127 = scmp.eq.s32.totalorder %s126, 0
      %s129 = sadd.s32 %s128, 1
      %s130 = scalar_select %p127, %s128, %s129
      %p133 = pneg %p127
      %p134 = scmp.eq.s32.totalorder %s13, 1
      %p135 = por %p133, %p134
      %p136 = scmp.ne.s32.totalorder %s128, %s131
      %p137 = scmp.eq.s32.totalorder %s13, 0
      %p138 = por %p136, %p137
      %p139 = scmp.ne.s32.totalorder %s128, %s131
      %p140 = scmp.eq.s32.totalorder %s18, 1
      %p141 = por %p139, %p140
      %p142 = scmp.ne.s32.totalorder %s131, %s132
      %p143 = scmp.eq.s32.totalorder %s18, 0
      %p144 = por %p142, %p143
      %p145 = scmp.ne.s32.totalorder %s131, %s132
      %p146 = scmp.eq.s32.totalorder %s19, 1
      %p147 = por %p145, %p146
      %p149 = scmp.ne.s32.totalorder %s132, %s148
      %p150 = scmp.eq.s32.totalorder %s19, 0
      %p151 = por %p149, %p150
      %p152 = scmp.le.s32.totalorder 1, %s13
      %p153 = scmp.lt.s32.totalorder %s13, 3
      %p154 = pnand %p152, %p153
      %p155 = pneg %p154
      // Predicated region
      $region9: #{tpu_custom_call.1} parent=5 // pred_check
        _
      $region10: #{tpu_custom_call.1} parent=5 // pred_check_branch
        %157 = sbr.rel (%p154) target = $region12
      $region11: #{tpu_custom_call.1} parent=5 // pred_region
        %s158 = ssub.s32 %s13, 1
        // Predicated region
        $region13: #{tpu_custom_call.1} parent=11 // pred_check
          %p159 = pneg %p74
        $region14: #{tpu_custom_call.1} parent=11 // pred_check_branch
          %161 = sbr.rel (%p159) target = $region16
        $region15: #{tpu_custom_call.1} parent=11 // pred_region
          _
        $region16: #{tpu_custom_call.1} parent=11 // pred_fallthru
          _
        // Predicated region
        $region17: #{tpu_custom_call.1} parent=11 // pred_check
          %p162 = pneg %p95
        $region18: #{tpu_custom_call.1} parent=11 // pred_check_branch
          %164 = sbr.rel (%p162) target = $region20
        $region19: #{tpu_custom_call.1} parent=11 // pred_region
          _
        $region20: #{tpu_custom_call.1} parent=11 // pred_fallthru
          _
        // Predicated region
        $region21: #{tpu_custom_call.1} parent=11 // pred_check
          %p165 = pneg %p116
        $region22: #{tpu_custom_call.1} parent=11 // pred_check_branch
          %167 = sbr.rel (%p165) target = $region24
        $region23: #{tpu_custom_call.1} parent=11 // pred_region
          _
        $region24: #{tpu_custom_call.1} parent=11 // pred_fallthru
          _
      $region12: #{tpu_custom_call.1} parent=5 // pred_fallthru
        _
      %p168 = scmp.lt.s32.totalorder %s13, 2
      // Predicated region
      $region25: #{tpu_custom_call.1} parent=5 // pred_check
        %p169 = pneg %p168
      $region26: #{tpu_custom_call.1} parent=5 // pred_check_branch
        %171 = sbr.rel (%p169) target = $region28
      $region27: #{tpu_custom_call.1} parent=5 // pred_region
        // Predicated region
        $region29: #{tpu_custom_call.1} parent=27 // pred_check
          %p172 = pneg %p47
        $region30: #{tpu_custom_call.1} parent=27 // pred_check_branch
          %174 = sbr.rel (%p172) target = $region32
        $region31: #{tpu_custom_call.1} parent=27 // pred_region
          %s175 = smul.u32 16, %s21
          %p176 = scmp.lt.s32.totalorder %s20, 1
          %s177 = scalar_select %p176, %s20, 1
          %p178 = scmp.lt.s32.totalorder %s175, 15
          %s179 = scalar_select %p178, %s175, 15
          %s180 = smul.addr %s179, 2
          %s181 = smul.addr %s177, 32
          %s182 = sadd.s32 %s180, %s181
          %s183 = smul.addr %s182, 4
          %s184 = scalar_lea.vmem %s0, %s183
          %s185 = smul.u32 16, %s21
        $region32: #{tpu_custom_call.1} parent=27 // pred_fallthru
          _
      $region28: #{tpu_custom_call.1} parent=5 // pred_fallthru
        _
      %p186 = scmp.le.s32.totalorder 1, %s13
      %p187 = scmp.lt.s32.totalorder %s13, 3
      %p188 = pnand %p186, %p187
      %p189 = pneg %p188
      // Predicated region
      $region33: #{tpu_custom_call.1} parent=5 // pred_check
        _
      $region34: #{tpu_custom_call.1} parent=5 // pred_check_branch
        %191 = sbr.rel (%p188) target = $region36
      $region35: #{tpu_custom_call.1} parent=5 // pred_region
        %s192 = ssub.s32 %s13, 1
        %s193 = smul.u32 16, %s23
        %p194 = scmp.lt.s32.totalorder %s22, 1
        %s195 = scalar_select %p194, %s22, 1
        %p196 = scmp.lt.s32.totalorder %s193, 15
        %s197 = scalar_select %p196, %s193, 15
        %s198 = smul.addr %s197, 2
        %s199 = smul.addr %s195, 32
        %s200 = sadd.s32 %s198, %s199
        %s201 = smul.addr %s200, 4
        %s202 = scalar_lea.vmem %s0, %s201
        %p203 = pneg %p53
        %p204 = pneg %p50
        %p205 = pneg %p74
        %p206 = pneg %p71
        %p207 = pneg %p95
        %p208 = pneg %p92
        %p209 = pneg %p116
        %p210 = pneg %p113
        %p211 = pneg %p144
        %p212 = pneg %p141
        %s213 = sand.u32 %s131, 1
        %s214 = scalar_lea.sflag [#allocation3], %s213
        %s215 = sand.u32 %s131, 1
        %s216 = smul.addr %s215, 64
        %s217 = scalar_lea.vmem [#allocation2], %s216
        %s218 = smul.u32 16, %s23
        %p219 = scmp.lt.s32.totalorder %s22, 1
        %s220 = scalar_select %p219, %s22, 1
        %p221 = scmp.lt.s32.totalorder %s218, 15
        %s222 = scalar_select %p221, %s218, 15
        %s223 = smul.addr %s222, 2
        %s224 = smul.addr %s220, 32
        %s225 = sadd.s32 %s223, %s224
        %s226 = smul.addr %s225, 4
        %s227 = scalar_lea.vmem %s0, %s226
        %s228 = smul.u32 16, %s23
        %s229 = smul.u32 8, %s23
        %v231 = vld [vmem:[%s227] sm:$0xf]
        %v232 = vld [vmem:[%s227 + $0x4] sm:$0xf]
        %v233 = vld [vmem:[%s227 + $0x8] sm:$0xf]
        %v234 = vld [vmem:[%s227 + $0xc] sm:$0xf]
        %v235 = vld [vmem:[%s227 + $0x10] sm:$0xf]
        %v236 = vld [vmem:[%s227 + $0x14] sm:$0xf]
        %v237 = vld [vmem:[%s227 + $0x18] sm:$0xf]
        %v238 = vld [vmem:[%s227 + $0x1c] sm:$0xf]
        %v239 = vld [vmem:[%s227 + $0x20] sm:$0xf]
        %v240 = vld [vmem:[%s227 + $0x24] sm:$0xf]
        %v241 = vld [vmem:[%s227 + $0x28] sm:$0xf]
        %v242 = vld [vmem:[%s227 + $0x2c] sm:$0xf]
        %v243 = vld [vmem:[%s227 + $0x30] sm:$0xf]
        %v244 = vld [vmem:[%s227 + $0x34] sm:$0xf]
        %v245 = vld [vmem:[%s227 + $0x38] sm:$0xf]
        %v246 = vld [vmem:[%s227 + $0x3c] sm:$0xf]
        %v247 = vld [vmem:[%s227 + $0x40] sm:$0xf]
        %v248 = vld [vmem:[%s227 + $0x44] sm:$0xf]
        %v249 = vld [vmem:[%s227 + $0x48] sm:$0xf]
        %v250 = vld [vmem:[%s227 + $0x4c] sm:$0xf]
        %v251 = vld [vmem:[%s227 + $0x50] sm:$0xf]
        %v252 = vld [vmem:[%s227 + $0x54] sm:$0xf]
        %v253 = vld [vmem:[%s227 + $0x58] sm:$0xf]
        %v254 = vld [vmem:[%s227 + $0x5c] sm:$0xf]
        %v255 = vld [vmem:[%s227 + $0x60] sm:$0xf]
        %v256 = vld [vmem:[%s227 + $0x64] sm:$0xf]
        %v257 = vld [vmem:[%s227 + $0x68] sm:$0xf]
        %v258 = vld [vmem:[%s227 + $0x6c] sm:$0xf]
        %v259 = vld [vmem:[%s227 + $0x70] sm:$0xf]
        %v260 = vld [vmem:[%s227 + $0x74] sm:$0xf]
        %v261 = vld [vmem:[%s227 + $0x78] sm:$0xf]
        %v262 = vld [vmem:[%s227 + $0x7c] sm:$0xf]
        %v263 = vunpack.c.l.bf16 %v231
        %v264 = vunpack.c.l.bf16 %v232
        %v265 = vunpack.c.l.bf16 %v233
        %v266 = vunpack.c.l.bf16 %v234
        %v267 = vunpack.c.l.bf16 %v235
        %v268 = vunpack.c.l.bf16 %v236
        %v269 = vunpack.c.l.bf16 %v237
        %v270 = vunpack.c.l.bf16 %v238
        %v271 = vunpack.c.l.bf16 %v239
        %v272 = vunpack.c.l.bf16 %v240
        %v273 = vunpack.c.l.bf16 %v241
        %v274 = vunpack.c.l.bf16 %v242
        %v275 = vunpack.c.l.bf16 %v243
        %v276 = vunpack.c.l.bf16 %v244
        %v277 = vunpack.c.l.bf16 %v245
        %v278 = vunpack.c.l.bf16 %v246
        %v279 = vunpack.c.l.bf16 %v247
        %v280 = vunpack.c.l.bf16 %v248
        %v281 = vunpack.c.l.bf16 %v249
        %v282 = vunpack.c.l.bf16 %v250
        %v283 = vunpack.c.l.bf16 %v251
        %v284 = vunpack.c.l.bf16 %v252
        %v285 = vunpack.c.l.bf16 %v253
        %v286 = vunpack.c.l.bf16 %v254
        %v287 = vunpack.c.l.bf16 %v255
        %v288 = vunpack.c.l.bf16 %v256
        %v289 = vunpack.c.l.bf16 %v257
        %v290 = vunpack.c.l.bf16 %v258
        %v291 = vunpack.c.l.bf16 %v259
        %v292 = vunpack.c.l.bf16 %v260
        %v293 = vunpack.c.l.bf16 %v261
        %v294 = vunpack.c.l.bf16 %v262
        %v295 = vld [vmem:[%s1] sm:$0x1]
        %v296 = vld [vmem:[%s2] sm:$0x1]
        %v298 = vlaneseq
        %v299 = vshrl.u32 %v298, 7
        %v300 = vsub.s32 0, %v299
        %v301 = vrot.slane %v295, %v300
        %v303 = vmul.f32 %v263, %v301
        %v304 = vmul.f32 %v264, %v301
        %v305 = vmul.f32 %v265, %v301
        %v306 = vmul.f32 %v266, %v301
        %v307 = vmul.f32 %v267, %v301
        %v308 = vmul.f32 %v268, %v301
        %v309 = vmul.f32 %v269, %v301
        %v310 = vmul.f32 %v270, %v301
        %v311 = vmul.f32 %v271, %v301
        %v312 = vmul.f32 %v272, %v301
        %v313 = vmul.f32 %v273, %v301
        %v314 = vmul.f32 %v274, %v301
        %v315 = vmul.f32 %v275, %v301
        %v316 = vmul.f32 %v276, %v301
        %v317 = vmul.f32 %v277, %v301
        %v318 = vmul.f32 %v278, %v301
        %v319 = vmul.f32 %v279, %v301
        %v320 = vmul.f32 %v280, %v301
        %v321 = vmul.f32 %v281, %v301
        %v322 = vmul.f32 %v282, %v301
        %v323 = vmul.f32 %v283, %v301
        %v324 = vmul.f32 %v284, %v301
        %v325 = vmul.f32 %v285, %v301
        %v326 = vmul.f32 %v286, %v301
        %v327 = vmul.f32 %v287, %v301
        %v328 = vmul.f32 %v288, %v301
        %v329 = vmul.f32 %v289, %v301
        %v330 = vmul.f32 %v290, %v301
        %v331 = vmul.f32 %v291, %v301
        %v332 = vmul.f32 %v292, %v301
        %v333 = vmul.f32 %v293, %v301
        %v334 = vmul.f32 %v294, %v301
        %v336 = vlaneseq
        %v337 = vshrl.u32 %v336, 7
        %v338 = vsub.s32 0, %v337
        %v339 = vrot.slane %v296, %v338
        %v341 = vadd.f32 %v303, %v339
        %v342 = vadd.f32 %v304, %v339
        %v343 = vadd.f32 %v305, %v339
        %v344 = vadd.f32 %v306, %v339
        %v345 = vadd.f32 %v307, %v339
        %v346 = vadd.f32 %v308, %v339
        %v347 = vadd.f32 %v309, %v339
        %v348 = vadd.f32 %v310, %v339
        %v349 = vadd.f32 %v311, %v339
        %v350 = vadd.f32 %v312, %v339
        %v351 = vadd.f32 %v313, %v339
        %v352 = vadd.f32 %v314, %v339
        %v353 = vadd.f32 %v315, %v339
        %v354 = vadd.f32 %v316, %v339
        %v355 = vadd.f32 %v317, %v339
        %v356 = vadd.f32 %v318, %v339
        %v357 = vadd.f32 %v319, %v339
        %v358 = vadd.f32 %v320, %v339
        %v359 = vadd.f32 %v321, %v339
        %v360 = vadd.f32 %v322, %v339
        %v361 = vadd.f32 %v323, %v339
        %v362 = vadd.f32 %v324, %v339
        %v363 = vadd.f32 %v325, %v339
        %v364 = vadd.f32 %v326, %v339
        %v365 = vadd.f32 %v327, %v339
        %v366 = vadd.f32 %v328, %v339
        %v367 = vadd.f32 %v329, %v339
        %v368 = vadd.f32 %v330, %v339
        %v369 = vadd.f32 %v331, %v339
        %v370 = vadd.f32 %v332, %v339
        %v371 = vadd.f32 %v333, %v339
        %v372 = vadd.f32 %v334, %v339
        %v373 = vmax.f32 %v341, 0.0
        %v374 = vmax.f32 %v342, 0.0
        %v375 = vmax.f32 %v343, 0.0
        %v376 = vmax.f32 %v344, 0.0
        %v377 = vmax.f32 %v345, 0.0
        %v378 = vmax.f32 %v346, 0.0
        %v379 = vmax.f32 %v347, 0.0
        %v380 = vmax.f32 %v348, 0.0
        %v381 = vmax.f32 %v349, 0.0
        %v382 = vmax.f32 %v350, 0.0
        %v383 = vmax.f32 %v351, 0.0
        %v384 = vmax.f32 %v352, 0.0
        %v385 = vmax.f32 %v353, 0.0
        %v386 = vmax.f32 %v354, 0.0
        %v387 = vmax.f32 %v355, 0.0
        %v388 = vmax.f32 %v356, 0.0
        %v389 = vmax.f32 %v357, 0.0
        %v390 = vmax.f32 %v358, 0.0
        %v391 = vmax.f32 %v359, 0.0
        %v392 = vmax.f32 %v360, 0.0
        %v393 = vmax.f32 %v361, 0.0
        %v394 = vmax.f32 %v362, 0.0
        %v395 = vmax.f32 %v363, 0.0
        %v396 = vmax.f32 %v364, 0.0
        %v397 = vmax.f32 %v365, 0.0
        %v398 = vmax.f32 %v366, 0.0
        %v399 = vmax.f32 %v367, 0.0
        %v400 = vmax.f32 %v368, 0.0
        %v401 = vmax.f32 %v369, 0.0
        %v402 = vmax.f32 %v370, 0.0
        %v403 = vmax.f32 %v371, 0.0
        %v404 = vmax.f32 %v372, 0.0
        %v405 = vadd.f32 %v373, %v375
        %v406 = vadd.f32 %v374, %v376
        %v407 = vadd.f32 %v377, %v379
        %v408 = vadd.f32 %v378, %v380
        %v409 = vadd.f32 %v381, %v383
        %v410 = vadd.f32 %v382, %v384
        %v411 = vadd.f32 %v385, %v387
        %v412 = vadd.f32 %v386, %v388
        %v413 = vadd.f32 %v389, %v391
        %v414 = vadd.f32 %v390, %v392
        %v415 = vadd.f32 %v393, %v395
        %v416 = vadd.f32 %v394, %v396
        %v417 = vadd.f32 %v397, %v399
        %v418 = vadd.f32 %v398, %v400
        %v419 = vadd.f32 %v401, %v403
        %v420 = vadd.f32 %v402, %v404
        %v437 = vcombine.high %v405, %v405
        %v439 = vunpack.c.l.s4 1983009808
        %v440 = vunpack.c.0.s8 %v439
        %v441 = vlaneseq
        %v442 = vshrl.u32 %v441, 7
        %v443 = vsub.s32 %v440, %v442
        %v444 = vrot.slane %v405, %v443
        %v446 = vunpack.c.l.s4 1983009808
        %v447 = vunpack.c.0.s8 %v446
        %v448 = vlaneseq
        %v449 = vshrl.u32 %v448, 7
        %v450 = vsub.s32 %v447, %v449
        %v451 = vrot.slane %v437, %v450
        %v452 = vcombine.high %v444, %v444
        %v453 = vcombine.high %v451, %v451
        %v454 = vcombine.high %v406, %v406
        %v456 = vunpack.c.l.s4 1983009808
        %v457 = vunpack.c.0.s8 %v456
        %v458 = vlaneseq
        %v459 = vshrl.u32 %v458, 7
        %v460 = vsub.s32 %v457, %v459
        %v461 = vrot.slane %v406, %v460
        %v463 = vunpack.c.l.s4 1983009808
        %v464 = vunpack.c.0.s8 %v463
        %v465 = vlaneseq
        %v466 = vshrl.u32 %v465, 7
        %v467 = vsub.s32 %v464, %v466
        %v468 = vrot.slane %v454, %v467
        %v469 = vcombine.high %v461, %v461
        %v470 = vcombine.high %v468, %v468
        %v471 = vcombine.high %v407, %v407
        %v473 = vunpack.c.l.s4 1983009808
        %v474 = vunpack.c.0.s8 %v473
        %v475 = vlaneseq
        %v476 = vshrl.u32 %v475, 7
        %v477 = vsub.s32 %v474, %v476
        %v478 = vrot.slane %v407, %v477
        %v480 = vunpack.c.l.s4 1983009808
        %v481 = vunpack.c.0.s8 %v480
        %v482 = vlaneseq
        %v483 = vshrl.u32 %v482, 7
        %v484 = vsub.s32 %v481, %v483
        %v485 = vrot.slane %v471, %v484
        %v486 = vcombine.high %v478, %v478
        %v487 = vcombine.high %v485, %v485
        %v488 = vcombine.high %v408, %v408
        %v490 = vunpack.c.l.s4 1983009808
        %v491 = vunpack.c.0.s8 %v490
        %v492 = vlaneseq
        %v493 = vshrl.u32 %v492, 7
        %v494 = vsub.s32 %v491, %v493
        %v495 = vrot.slane %v408, %v494
        %v497 = vunpack.c.l.s4 1983009808
        %v498 = vunpack.c.0.s8 %v497
        %v499 = vlaneseq
        %v500 = vshrl.u32 %v499, 7
        %v501 = vsub.s32 %v498, %v500
        %v502 = vrot.slane %v488, %v501
        %v503 = vcombine.high %v495, %v495
        %v504 = vcombine.high %v502, %v502
        %v505 = vcombine.high %v409, %v409
        %v507 = vunpack.c.l.s4 1983009808
        %v508 = vunpack.c.0.s8 %v507
        %v509 = vlaneseq
        %v510 = vshrl.u32 %v509, 7
        %v511 = vsub.s32 %v508, %v510
        %v512 = vrot.slane %v409, %v511
        %v514 = vunpack.c.l.s4 1983009808
        %v515 = vunpack.c.0.s8 %v514
        %v516 = vlaneseq
        %v517 = vshrl.u32 %v516, 7
        %v518 = vsub.s32 %v515, %v517
        %v519 = vrot.slane %v505, %v518
        %v520 = vcombine.high %v512, %v512
        %v521 = vcombine.high %v519, %v519
        %v522 = vcombine.high %v410, %v410
        %v524 = vunpack.c.l.s4 1983009808
        %v525 = vunpack.c.0.s8 %v524
        %v526 = vlaneseq
        %v527 = vshrl.u32 %v526, 7
        %v528 = vsub.s32 %v525, %v527
        %v529 = vrot.slane %v410, %v528
        %v531 = vunpack.c.l.s4 1983009808
        %v532 = vunpack.c.0.s8 %v531
        %v533 = vlaneseq
        %v534 = vshrl.u32 %v533, 7
        %v535 = vsub.s32 %v532, %v534
        %v536 = vrot.slane %v522, %v535
        %v537 = vcombine.high %v529, %v529
        %v538 = vcombine.high %v536, %v536
        %v539 = vcombine.high %v411, %v411
        %v541 = vunpack.c.l.s4 1983009808
        %v542 = vunpack.c.0.s8 %v541
        %v543 = vlaneseq
        %v544 = vshrl.u32 %v543, 7
        %v545 = vsub.s32 %v542, %v544
        %v546 = vrot.slane %v411, %v545
        %v548 = vunpack.c.l.s4 1983009808
        %v549 = vunpack.c.0.s8 %v548
        %v550 = vlaneseq
        %v551 = vshrl.u32 %v550, 7
        %v552 = vsub.s32 %v549, %v551
        %v553 = vrot.slane %v539, %v552
        %v554 = vcombine.high %v546, %v546
        %v555 = vcombine.high %v553, %v553
        %v556 = vcombine.high %v412, %v412
        %v558 = vunpack.c.l.s4 1983009808
        %v559 = vunpack.c.0.s8 %v558
        %v560 = vlaneseq
        %v561 = vshrl.u32 %v560, 7
        %v562 = vsub.s32 %v559, %v561
        %v563 = vrot.slane %v412, %v562
        %v565 = vunpack.c.l.s4 1983009808
        %v566 = vunpack.c.0.s8 %v565
        %v567 = vlaneseq
        %v568 = vshrl.u32 %v567, 7
        %v569 = vsub.s32 %v566, %v568
        %v570 = vrot.slane %v556, %v569
        %v571 = vcombine.high %v563, %v563
        %v572 = vcombine.high %v570, %v570
        %v573 = vcombine.high %v413, %v413
        %v575 = vunpack.c.l.s4 1983009808
        %v576 = vunpack.c.0.s8 %v575
        %v577 = vlaneseq
        %v578 = vshrl.u32 %v577, 7
        %v579 = vsub.s32 %v576, %v578
        %v580 = vrot.slane %v413, %v579
        %v582 = vunpack.c.l.s4 1983009808
        %v583 = vunpack.c.0.s8 %v582
        %v584 = vlaneseq
        %v585 = vshrl.u32 %v584, 7
        %v586 = vsub.s32 %v583, %v585
        %v587 = vrot.slane %v573, %v586
        %v588 = vcombine.high %v580, %v580
        %v589 = vcombine.high %v587, %v587
        %v590 = vcombine.high %v414, %v414
        %v592 = vunpack.c.l.s4 1983009808
        %v593 = vunpack.c.0.s8 %v592
        %v594 = vlaneseq
        %v595 = vshrl.u32 %v594, 7
        %v596 = vsub.s32 %v593, %v595
        %v597 = vrot.slane %v414, %v596
        %v599 = vunpack.c.l.s4 1983009808
        %v600 = vunpack.c.0.s8 %v599
        %v601 = vlaneseq
        %v602 = vshrl.u32 %v601, 7
        %v603 = vsub.s32 %v600, %v602
        %v604 = vrot.slane %v590, %v603
        %v605 = vcombine.high %v597, %v597
        %v606 = vcombine.high %v604, %v604
        %v607 = vcombine.high %v415, %v415
        %v609 = vunpack.c.l.s4 1983009808
        %v610 = vunpack.c.0.s8 %v609
        %v611 = vlaneseq
        %v612 = vshrl.u32 %v611, 7
        %v613 = vsub.s32 %v610, %v612
        %v614 = vrot.slane %v415, %v613
        %v616 = vunpack.c.l.s4 1983009808
        %v617 = vunpack.c.0.s8 %v616
        %v618 = vlaneseq
        %v619 = vshrl.u32 %v618, 7
        %v620 = vsub.s32 %v617, %v619
        %v621 = vrot.slane %v607, %v620
        %v622 = vcombine.high %v614, %v614
        %v623 = vcombine.high %v621, %v621
        %v624 = vcombine.high %v416, %v416
        %v626 = vunpack.c.l.s4 1983009808
        %v627 = vunpack.c.0.s8 %v626
        %v628 = vlaneseq
        %v629 = vshrl.u32 %v628, 7
        %v630 = vsub.s32 %v627, %v629
        %v631 = vrot.slane %v416, %v630
        %v633 = vunpack.c.l.s4 1983009808
        %v634 = vunpack.c.0.s8 %v633
        %v635 = vlaneseq
        %v636 = vshrl.u32 %v635, 7
        %v637 = vsub.s32 %v634, %v636
        %v638 = vrot.slane %v624, %v637
        %v639 = vcombine.high %v631, %v631
        %v640 = vcombine.high %v638, %v638
        %v641 = vcombine.high %v417, %v417
        %v643 = vunpack.c.l.s4 1983009808
        %v644 = vunpack.c.0.s8 %v643
        %v645 = vlaneseq
        %v646 = vshrl.u32 %v645, 7
        %v647 = vsub.s32 %v644, %v646
        %v648 = vrot.slane %v417, %v647
        %v650 = vunpack.c.l.s4 1983009808
        %v651 = vunpack.c.0.s8 %v650
        %v652 = vlaneseq
        %v653 = vshrl.u32 %v652, 7
        %v654 = vsub.s32 %v651, %v653
        %v655 = vrot.slane %v641, %v654
        %v656 = vcombine.high %v648, %v648
        %v657 = vcombine.high %v655, %v655
        %v658 = vcombine.high %v418, %v418
        %v660 = vunpack.c.l.s4 1983009808
        %v661 = vunpack.c.0.s8 %v660
        %v662 = vlaneseq
        %v663 = vshrl.u32 %v662, 7
        %v664 = vsub.s32 %v661, %v663
        %v665 = vrot.slane %v418, %v664
        %v667 = vunpack.c.l.s4 1983009808
        %v668 = vunpack.c.0.s8 %v667
        %v669 = vlaneseq
        %v670 = vshrl.u32 %v669, 7
        %v671 = vsub.s32 %v668, %v670
        %v672 = vrot.slane %v658, %v671
        %v673 = vcombine.high %v665, %v665
        %v674 = vcombine.high %v672, %v672
        %v675 = vcombine.high %v419, %v419
        %v677 = vunpack.c.l.s4 1983009808
        %v678 = vunpack.c.0.s8 %v677
        %v679 = vlaneseq
        %v680 = vshrl.u32 %v679, 7
        %v681 = vsub.s32 %v678, %v680
        %v682 = vrot.slane %v419, %v681
        %v684 = vunpack.c.l.s4 1983009808
        %v685 = vunpack.c.0.s8 %v684
        %v686 = vlaneseq
        %v687 = vshrl.u32 %v686, 7
        %v688 = vsub.s32 %v685, %v687
        %v689 = vrot.slane %v675, %v688
        %v690 = vcombine.high %v682, %v682
        %v691 = vcombine.high %v689, %v689
        %v692 = vcombine.high %v420, %v420
        %v694 = vunpack.c.l.s4 1983009808
        %v695 = vunpack.c.0.s8 %v694
        %v696 = vlaneseq
        %v697 = vshrl.u32 %v696, 7
        %v698 = vsub.s32 %v695, %v697
        %v699 = vrot.slane %v420, %v698
        %v701 = vunpack.c.l.s4 1983009808
        %v702 = vunpack.c.0.s8 %v701
        %v703 = vlaneseq
        %v704 = vshrl.u32 %v703, 7
        %v705 = vsub.s32 %v702, %v704
        %v706 = vrot.slane %v692, %v705
        %v707 = vcombine.high %v699, %v699
        %v708 = vcombine.high %v706, %v706
        %v773 = vrot.slane %v444, 7
        %v774 = vrot.slane %v773, 2
        %v775 = vrot.slane %v452, 7
        %v776 = vrot.slane %v775, 2
        %v777 = vrot.slane %v451, 7
        %v778 = vrot.slane %v777, 2
        %v779 = vrot.slane %v453, 7
        %v780 = vrot.slane %v779, 2
        %v781 = vrot.slane %v461, 7
        %v782 = vrot.slane %v781, 2
        %v783 = vrot.slane %v469, 7
        %v784 = vrot.slane %v783, 2
        %v785 = vrot.slane %v468, 7
        %v786 = vrot.slane %v785, 2
        %v787 = vrot.slane %v470, 7
        %v788 = vrot.slane %v787, 2
        %v789 = vrot.slane %v478, 7
        %v790 = vrot.slane %v789, 2
        %v791 = vrot.slane %v486, 7
        %v792 = vrot.slane %v791, 2
        %v793 = vrot.slane %v485, 7
        %v794 = vrot.slane %v793, 2
        %v795 = vrot.slane %v487, 7
        %v796 = vrot.slane %v795, 2
        %v797 = vrot.slane %v495, 7
        %v798 = vrot.slane %v797, 2
        %v799 = vrot.slane %v503, 7
        %v800 = vrot.slane %v799, 2
        %v801 = vrot.slane %v502, 7
        %v802 = vrot.slane %v801, 2
        %v803 = vrot.slane %v504, 7
        %v804 = vrot.slane %v803, 2
        %v805 = vrot.slane %v512, 7
        %v806 = vrot.slane %v805, 2
        %v807 = vrot.slane %v520, 7
        %v808 = vrot.slane %v807, 2
        %v809 = vrot.slane %v519, 7
        %v810 = vrot.slane %v809, 2
        %v811 = vrot.slane %v521, 7
        %v812 = vrot.slane %v811, 2
        %v813 = vrot.slane %v529, 7
        %v814 = vrot.slane %v813, 2
        %v815 = vrot.slane %v537, 7
        %v816 = vrot.slane %v815, 2
        %v817 = vrot.slane %v536, 7
        %v818 = vrot.slane %v817, 2
        %v819 = vrot.slane %v538, 7
        %v820 = vrot.slane %v819, 2
        %v821 = vrot.slane %v546, 7
        %v822 = vrot.slane %v821, 2
        %v823 = vrot.slane %v554, 7
        %v824 = vrot.slane %v823, 2
        %v825 = vrot.slane %v553, 7
        %v826 = vrot.slane %v825, 2
        %v827 = vrot.slane %v555, 7
        %v828 = vrot.slane %v827, 2
        %v829 = vrot.slane %v563, 7
        %v830 = vrot.slane %v829, 2
        %v831 = vrot.slane %v571, 7
        %v832 = vrot.slane %v831, 2
        %v833 = vrot.slane %v570, 7
        %v834 = vrot.slane %v833, 2
        %v835 = vrot.slane %v572, 7
        %v836 = vrot.slane %v835, 2
        %v837 = vrot.slane %v580, 7
        %v838 = vrot.slane %v837, 2
        %v839 = vrot.slane %v588, 7
        %v840 = vrot.slane %v839, 2
        %v841 = vrot.slane %v587, 7
        %v842 = vrot.slane %v841, 2
        %v843 = vrot.slane %v589, 7
        %v844 = vrot.slane %v843, 2
        %v845 = vrot.slane %v597, 7
        %v846 = vrot.slane %v845, 2
        %v847 = vrot.slane %v605, 7
        %v848 = vrot.slane %v847, 2
        %v849 = vrot.slane %v604, 7
        %v850 = vrot.slane %v849, 2
        %v851 = vrot.slane %v606, 7
        %v852 = vrot.slane %v851, 2
        %v853 = vrot.slane %v614, 7
        %v854 = vrot.slane %v853, 2
        %v855 = vrot.slane %v622, 7
        %v856 = vrot.slane %v855, 2
        %v857 = vrot.slane %v621, 7
        %v858 = vrot.slane %v857, 2
        %v859 = vrot.slane %v623, 7
        %v860 = vrot.slane %v859, 2
        %v861 = vrot.slane %v631, 7
        %v862 = vrot.slane %v861, 2
        %v863 = vrot.slane %v639, 7
        %v864 = vrot.slane %v863, 2
        %v865 = vrot.slane %v638, 7
        %v866 = vrot.slane %v865, 2
        %v867 = vrot.slane %v640, 7
        %v868 = vrot.slane %v867, 2
        %v869 = vrot.slane %v648, 7
        %v870 = vrot.slane %v869, 2
        %v871 = vrot.slane %v656, 7
        %v872 = vrot.slane %v871, 2
        %v873 = vrot.slane %v655, 7
        %v874 = vrot.slane %v873, 2
        %v875 = vrot.slane %v657, 7
        %v876 = vrot.slane %v875, 2
        %v877 = vrot.slane %v665, 7
        %v878 = vrot.slane %v877, 2
        %v879 = vrot.slane %v673, 7
        %v880 = vrot.slane %v879, 2
        %v881 = vrot.slane %v672, 7
        %v882 = vrot.slane %v881, 2
        %v883 = vrot.slane %v674, 7
        %v884 = vrot.slane %v883, 2
        %v885 = vrot.slane %v682, 7
        %v886 = vrot.slane %v885, 2
        %v887 = vrot.slane %v690, 7
        %v888 = vrot.slane %v887, 2
        %v889 = vrot.slane %v689, 7
        %v890 = vrot.slane %v889, 2
        %v891 = vrot.slane %v691, 7
        %v892 = vrot.slane %v891, 2
        %v893 = vrot.slane %v699, 7
        %v894 = vrot.slane %v893, 2
        %v895 = vrot.slane %v707, 7
        %v896 = vrot.slane %v895, 2
        %v897 = vrot.slane %v706, 7
        %v898 = vrot.slane %v897, 2
        %v899 = vrot.slane %v708, 7
        %v900 = vrot.slane %v899, 2
        %v965 = vadd.f32 %v444, %v774
        %v966 = vadd.f32 %v452, %v776
        %v967 = vadd.f32 %v451, %v778
        %v968 = vadd.f32 %v453, %v780
        %v969 = vadd.f32 %v461, %v782
        %v970 = vadd.f32 %v469, %v784
        %v971 = vadd.f32 %v468, %v786
        %v972 = vadd.f32 %v470, %v788
        %v973 = vadd.f32 %v478, %v790
        %v974 = vadd.f32 %v486, %v792
        %v975 = vadd.f32 %v485, %v794
        %v976 = vadd.f32 %v487, %v796
        %v977 = vadd.f32 %v495, %v798
        %v978 = vadd.f32 %v503, %v800
        %v979 = vadd.f32 %v502, %v802
        %v980 = vadd.f32 %v504, %v804
        %v981 = vadd.f32 %v512, %v806
        %v982 = vadd.f32 %v520, %v808
        %v983 = vadd.f32 %v519, %v810
        %v984 = vadd.f32 %v521, %v812
        %v985 = vadd.f32 %v529, %v814
        %v986 = vadd.f32 %v537, %v816
        %v987 = vadd.f32 %v536, %v818
        %v988 = vadd.f32 %v538, %v820
        %v989 = vadd.f32 %v546, %v822
        %v990 = vadd.f32 %v554, %v824
        %v991 = vadd.f32 %v553, %v826
        %v992 = vadd.f32 %v555, %v828
        %v993 = vadd.f32 %v563, %v830
        %v994 = vadd.f32 %v571, %v832
        %v995 = vadd.f32 %v570, %v834
        %v996 = vadd.f32 %v572, %v836
        %v997 = vadd.f32 %v580, %v838
        %v998 = vadd.f32 %v588, %v840
        %v999 = vadd.f32 %v587, %v842
        %v1000 = vadd.f32 %v589, %v844
        %v1001 = vadd.f32 %v597, %v846
        %v1002 = vadd.f32 %v605, %v848
        %v1003 = vadd.f32 %v604, %v850
        %v1004 = vadd.f32 %v606, %v852
        %v1005 = vadd.f32 %v614, %v854
        %v1006 = vadd.f32 %v622, %v856
        %v1007 = vadd.f32 %v621, %v858
        %v1008 = vadd.f32 %v623, %v860
        %v1009 = vadd.f32 %v631, %v862
        %v1010 = vadd.f32 %v639, %v864
        %v1011 = vadd.f32 %v638, %v866
        %v1012 = vadd.f32 %v640, %v868
        %v1013 = vadd.f32 %v648, %v870
        %v1014 = vadd.f32 %v656, %v872
        %v1015 = vadd.f32 %v655, %v874
        %v1016 = vadd.f32 %v657, %v876
        %v1017 = vadd.f32 %v665, %v878
        %v1018 = vadd.f32 %v673, %v880
        %v1019 = vadd.f32 %v672, %v882
        %v1020 = vadd.f32 %v674, %v884
        %v1021 = vadd.f32 %v682, %v886
        %v1022 = vadd.f32 %v690, %v888
        %v1023 = vadd.f32 %v689, %v890
        %v1024 = vadd.f32 %v691, %v892
        %v1025 = vadd.f32 %v699, %v894
        %v1026 = vadd.f32 %v707, %v896
        %v1027 = vadd.f32 %v706, %v898
        %v1028 = vadd.f32 %v708, %v900
        %v1029 = vmul.f32 %v965, 0.25
        %v1030 = vmul.f32 %v966, 0.25
        %v1031 = vmul.f32 %v967, 0.25
        %v1032 = vmul.f32 %v968, 0.25
        %v1033 = vmul.f32 %v969, 0.25
        %v1034 = vmul.f32 %v970, 0.25
        %v1035 = vmul.f32 %v971, 0.25
        %v1036 = vmul.f32 %v972, 0.25
        %v1037 = vmul.f32 %v973, 0.25
        %v1038 = vmul.f32 %v974, 0.25
        %v1039 = vmul.f32 %v975, 0.25
        %v1040 = vmul.f32 %v976, 0.25
        %v1041 = vmul.f32 %v977, 0.25
        %v1042 = vmul.f32 %v978, 0.25
        %v1043 = vmul.f32 %v979, 0.25
        %v1044 = vmul.f32 %v980, 0.25
        %v1045 = vmul.f32 %v981, 0.25
        %v1046 = vmul.f32 %v982, 0.25
        %v1047 = vmul.f32 %v983, 0.25
        %v1048 = vmul.f32 %v984, 0.25
        %v1049 = vmul.f32 %v985, 0.25
        %v1050 = vmul.f32 %v986, 0.25
        %v1051 = vmul.f32 %v987, 0.25
        %v1052 = vmul.f32 %v988, 0.25
        %v1053 = vmul.f32 %v989, 0.25
        %v1054 = vmul.f32 %v990, 0.25
        %v1055 = vmul.f32 %v991, 0.25
        %v1056 = vmul.f32 %v992, 0.25
        %v1057 = vmul.f32 %v993, 0.25
        %v1058 = vmul.f32 %v994, 0.25
        %v1059 = vmul.f32 %v995, 0.25
        %v1060 = vmul.f32 %v996, 0.25
        %v1061 = vmul.f32 %v997, 0.25
        %v1062 = vmul.f32 %v998, 0.25
        %v1063 = vmul.f32 %v999, 0.25
        %v1064 = vmul.f32 %v1000, 0.25
        %v1065 = vmul.f32 %v1001, 0.25
        %v1066 = vmul.f32 %v1002, 0.25
        %v1067 = vmul.f32 %v1003, 0.25
        %v1068 = vmul.f32 %v1004, 0.25
        %v1069 = vmul.f32 %v1005, 0.25
        %v1070 = vmul.f32 %v1006, 0.25
        %v1071 = vmul.f32 %v1007, 0.25
        %v1072 = vmul.f32 %v1008, 0.25
        %v1073 = vmul.f32 %v1009, 0.25
        %v1074 = vmul.f32 %v1010, 0.25
        %v1075 = vmul.f32 %v1011, 0.25
        %v1076 = vmul.f32 %v1012, 0.25
        %v1077 = vmul.f32 %v1013, 0.25
        %v1078 = vmul.f32 %v1014, 0.25
        %v1079 = vmul.f32 %v1015, 0.25
        %v1080 = vmul.f32 %v1016, 0.25
        %v1081 = vmul.f32 %v1017, 0.25
        %v1082 = vmul.f32 %v1018, 0.25
        %v1083 = vmul.f32 %v1019, 0.25
        %v1084 = vmul.f32 %v1020, 0.25
        %v1085 = vmul.f32 %v1021, 0.25
        %v1086 = vmul.f32 %v1022, 0.25
        %v1087 = vmul.f32 %v1023, 0.25
        %v1088 = vmul.f32 %v1024, 0.25
        %v1089 = vmul.f32 %v1025, 0.25
        %v1090 = vmul.f32 %v1026, 0.25
        %v1091 = vmul.f32 %v1027, 0.25
        %v1092 = vmul.f32 %v1028, 0.25
        %v1093 = vpack.c.bf16 %v1029, %v1029
        %v1094 = vpack.c.bf16 %v1030, %v1030
        %v1095 = vpack.c.bf16 %v1031, %v1031
        %v1096 = vpack.c.bf16 %v1032, %v1032
        %v1097 = vpack.c.bf16 %v1033, %v1033
        %v1098 = vpack.c.bf16 %v1034, %v1034
        %v1099 = vpack.c.bf16 %v1035, %v1035
        %v1100 = vpack.c.bf16 %v1036, %v1036
        %v1101 = vpack.c.bf16 %v1037, %v1037
        %v1102 = vpack.c.bf16 %v1038, %v1038
        %v1103 = vpack.c.bf16 %v1039, %v1039
        %v1104 = vpack.c.bf16 %v1040, %v1040
        %v1105 = vpack.c.bf16 %v1041, %v1041
        %v1106 = vpack.c.bf16 %v1042, %v1042
        %v1107 = vpack.c.bf16 %v1043, %v1043
        %v1108 = vpack.c.bf16 %v1044, %v1044
        %v1109 = vpack.c.bf16 %v1045, %v1045
        %v1110 = vpack.c.bf16 %v1046, %v1046
        %v1111 = vpack.c.bf16 %v1047, %v1047
        %v1112 = vpack.c.bf16 %v1048, %v1048
        %v1113 = vpack.c.bf16 %v1049, %v1049
        %v1114 = vpack.c.bf16 %v1050, %v1050
        %v1115 = vpack.c.bf16 %v1051, %v1051
        %v1116 = vpack.c.bf16 %v1052, %v1052
        %v1117 = vpack.c.bf16 %v1053, %v1053
        %v1118 = vpack.c.bf16 %v1054, %v1054
        %v1119 = vpack.c.bf16 %v1055, %v1055
        %v1120 = vpack.c.bf16 %v1056, %v1056
        %v1121 = vpack.c.bf16 %v1057, %v1057
        %v1122 = vpack.c.bf16 %v1058, %v1058
        %v1123 = vpack.c.bf16 %v1059, %v1059
        %v1124 = vpack.c.bf16 %v1060, %v1060
        %v1125 = vpack.c.bf16 %v1061, %v1061
        %v1126 = vpack.c.bf16 %v1062, %v1062
        %v1127 = vpack.c.bf16 %v1063, %v1063
        %v1128 = vpack.c.bf16 %v1064, %v1064
        %v1129 = vpack.c.bf16 %v1065, %v1065
        %v1130 = vpack.c.bf16 %v1066, %v1066
        %v1131 = vpack.c.bf16 %v1067, %v1067
        %v1132 = vpack.c.bf16 %v1068, %v1068
        %v1133 = vpack.c.bf16 %v1069, %v1069
        %v1134 = vpack.c.bf16 %v1070, %v1070
        %v1135 = vpack.c.bf16 %v1071, %v1071
        %v1136 = vpack.c.bf16 %v1072, %v1072
        %v1137 = vpack.c.bf16 %v1073, %v1073
        %v1138 = vpack.c.bf16 %v1074, %v1074
        %v1139 = vpack.c.bf16 %v1075, %v1075
        %v1140 = vpack.c.bf16 %v1076, %v1076
        %v1141 = vpack.c.bf16 %v1077, %v1077
        %v1142 = vpack.c.bf16 %v1078, %v1078
        %v1143 = vpack.c.bf16 %v1079, %v1079
        %v1144 = vpack.c.bf16 %v1080, %v1080
        %v1145 = vpack.c.bf16 %v1081, %v1081
        %v1146 = vpack.c.bf16 %v1082, %v1082
        %v1147 = vpack.c.bf16 %v1083, %v1083
        %v1148 = vpack.c.bf16 %v1084, %v1084
        %v1149 = vpack.c.bf16 %v1085, %v1085
        %v1150 = vpack.c.bf16 %v1086, %v1086
        %v1151 = vpack.c.bf16 %v1087, %v1087
        %v1152 = vpack.c.bf16 %v1088, %v1088
        %v1153 = vpack.c.bf16 %v1089, %v1089
        %v1154 = vpack.c.bf16 %v1090, %v1090
        %v1155 = vpack.c.bf16 %v1091, %v1091
        %v1156 = vpack.c.bf16 %v1092, %v1092
        %v1157 = vld [vmem:[%s3] sm:$0xf]
        %v1222 = vunpack.c.l.b16 %v1093
        %v1223 = vunpack.c.l.b16 %v1094
        %v1224 = vunpack.c.l.b16 %v1095
        %v1225 = vunpack.c.l.b16 %v1096
        %v1226 = vunpack.c.l.b16 %v1097
        %v1227 = vunpack.c.l.b16 %v1098
        %v1228 = vunpack.c.l.b16 %v1099
        %v1229 = vunpack.c.l.b16 %v1100
        %v1230 = vunpack.c.l.b16 %v1101
        %v1231 = vunpack.c.l.b16 %v1102
        %v1232 = vunpack.c.l.b16 %v1103
        %v1233 = vunpack.c.l.b16 %v1104
        %v1234 = vunpack.c.l.b16 %v1105
        %v1235 = vunpack.c.l.b16 %v1106
        %v1236 = vunpack.c.l.b16 %v1107
        %v1237 = vunpack.c.l.b16 %v1108
        %v1238 = vunpack.c.l.b16 %v1109
        %v1239 = vunpack.c.l.b16 %v1110
        %v1240 = vunpack.c.l.b16 %v1111
        %v1241 = vunpack.c.l.b16 %v1112
        %v1242 = vunpack.c.l.b16 %v1113
        %v1243 = vunpack.c.l.b16 %v1114
        %v1244 = vunpack.c.l.b16 %v1115
        %v1245 = vunpack.c.l.b16 %v1116
        %v1246 = vunpack.c.l.b16 %v1117
        %v1247 = vunpack.c.l.b16 %v1118
        %v1248 = vunpack.c.l.b16 %v1119
        %v1249 = vunpack.c.l.b16 %v1120
        %v1250 = vunpack.c.l.b16 %v1121
        %v1251 = vunpack.c.l.b16 %v1122
        %v1252 = vunpack.c.l.b16 %v1123
        %v1253 = vunpack.c.l.b16 %v1124
        %v1254 = vunpack.c.l.b16 %v1125
        %v1255 = vunpack.c.l.b16 %v1126
        %v1256 = vunpack.c.l.b16 %v1127
        %v1257 = vunpack.c.l.b16 %v1128
        %v1258 = vunpack.c.l.b16 %v1129
        %v1259 = vunpack.c.l.b16 %v1130
        %v1260 = vunpack.c.l.b16 %v1131
        %v1261 = vunpack.c.l.b16 %v1132
        %v1262 = vunpack.c.l.b16 %v1133
        %v1263 = vunpack.c.l.b16 %v1134
        %v1264 = vunpack.c.l.b16 %v1135
        %v1265 = vunpack.c.l.b16 %v1136
        %v1266 = vunpack.c.l.b16 %v1137
        %v1267 = vunpack.c.l.b16 %v1138
        %v1268 = vunpack.c.l.b16 %v1139
        %v1269 = vunpack.c.l.b16 %v1140
        %v1270 = vunpack.c.l.b16 %v1141
        %v1271 = vunpack.c.l.b16 %v1142
        %v1272 = vunpack.c.l.b16 %v1143
        %v1273 = vunpack.c.l.b16 %v1144
        %v1274 = vunpack.c.l.b16 %v1145
        %v1275 = vunpack.c.l.b16 %v1146
        %v1276 = vunpack.c.l.b16 %v1147
        %v1277 = vunpack.c.l.b16 %v1148
        %v1278 = vunpack.c.l.b16 %v1149
        %v1279 = vunpack.c.l.b16 %v1150
        %v1280 = vunpack.c.l.b16 %v1151
        %v1281 = vunpack.c.l.b16 %v1152
        %v1282 = vunpack.c.l.b16 %v1153
        %v1283 = vunpack.c.l.b16 %v1154
        %v1284 = vunpack.c.l.b16 %v1155
        %v1285 = vunpack.c.l.b16 %v1156
        %v1286 = vrot.slane %v1223, 7
        %vm1287 = vcmask 1041409
        %v1288 = vsel %vm1287, %v1286, %v1222
        %v1289 = vrot.slane %v1224, 6
        %vm1290 = vcmask 1042434
        %v1291 = vsel %vm1290, %v1289, %v1288
        %v1292 = vrot.slane %v1225, 5
        %vm1293 = vcmask 1043459
        %v1294 = vsel %vm1293, %v1292, %v1291
        %v1295 = vrot.slane %v1226, 4
        %vm1296 = vcmask 1044484
        %v1297 = vsel %vm1296, %v1295, %v1294
        %v1298 = vrot.slane %v1227, 3
        %vm1299 = vcmask 1045509
        %v1300 = vsel %vm1299, %v1298, %v1297
        %v1301 = vrot.slane %v1228, 2
        %vm1302 = vcmask 1046534
        %v1303 = vsel %vm1302, %v1301, %v1300
        %v1304 = vrot.slane %v1229, 1
        %vm1305 = vcmask 1047559
        %v1306 = vsel %vm1305, %v1304, %v1303
        %v1307 = vrot.slane %v1231, 7
        %v1308 = vsel %vm1287, %v1307, %v1230
        %v1309 = vrot.slane %v1232, 6
        %v1310 = vsel %vm1290, %v1309, %v1308
        %v1311 = vrot.slane %v1233, 5
        %v1312 = vsel %vm1293, %v1311, %v1310
        %v1313 = vrot.slane %v1234, 4
        %v1314 = vsel %vm1296, %v1313, %v1312
        %v1315 = vrot.slane %v1235, 3
        %v1316 = vsel %vm1299, %v1315, %v1314
        %v1317 = vrot.slane %v1236, 2
        %v1318 = vsel %vm1302, %v1317, %v1316
        %v1319 = vrot.slane %v1237, 1
        %v1320 = vsel %vm1305, %v1319, %v1318
        %v1321 = vrot.slane %v1239, 7
        %v1322 = vsel %vm1287, %v1321, %v1238
        %v1323 = vrot.slane %v1240, 6
        %v1324 = vsel %vm1290, %v1323, %v1322
        %v1325 = vrot.slane %v1241, 5
        %v1326 = vsel %vm1293, %v1325, %v1324
        %v1327 = vrot.slane %v1242, 4
        %v1328 = vsel %vm1296, %v1327, %v1326
        %v1329 = vrot.slane %v1243, 3
        %v1330 = vsel %vm1299, %v1329, %v1328
        %v1331 = vrot.slane %v1244, 2
        %v1332 = vsel %vm1302, %v1331, %v1330
        %v1333 = vrot.slane %v1245, 1
        %v1334 = vsel %vm1305, %v1333, %v1332
        %v1335 = vrot.slane %v1247, 7
        %v1336 = vsel %vm1287, %v1335, %v1246
        %v1337 = vrot.slane %v1248, 6
        %v1338 = vsel %vm1290, %v1337, %v1336
        %v1339 = vrot.slane %v1249, 5
        %v1340 = vsel %vm1293, %v1339, %v1338
        %v1341 = vrot.slane %v1250, 4
        %v1342 = vsel %vm1296, %v1341, %v1340
        %v1343 = vrot.slane %v1251, 3
        %v1344 = vsel %vm1299, %v1343, %v1342
        %v1345 = vrot.slane %v1252, 2
        %v1346 = vsel %vm1302, %v1345, %v1344
        %v1347 = vrot.slane %v1253, 1
        %v1348 = vsel %vm1305, %v1347, %v1346
        %v1349 = vrot.slane %v1255, 7
        %v1350 = vsel %vm1287, %v1349, %v1254
        %v1351 = vrot.slane %v1256, 6
        %v1352 = vsel %vm1290, %v1351, %v1350
        %v1353 = vrot.slane %v1257, 5
        %v1354 = vsel %vm1293, %v1353, %v1352
        %v1355 = vrot.slane %v1258, 4
        %v1356 = vsel %vm1296, %v1355, %v1354
        %v1357 = vrot.slane %v1259, 3
        %v1358 = vsel %vm1299, %v1357, %v1356
        %v1359 = vrot.slane %v1260, 2
        %v1360 = vsel %vm1302, %v1359, %v1358
        %v1361 = vrot.slane %v1261, 1
        %v1362 = vsel %vm1305, %v1361, %v1360
        %v1363 = vrot.slane %v1263, 7
        %v1364 = vsel %vm1287, %v1363, %v1262
        %v1365 = vrot.slane %v1264, 6
        %v1366 = vsel %vm1290, %v1365, %v1364
        %v1367 = vrot.slane %v1265, 5
        %v1368 = vsel %vm1293, %v1367, %v1366
        %v1369 = vrot.slane %v1266, 4
        %v1370 = vsel %vm1296, %v1369, %v1368
        %v1371 = vrot.slane %v1267, 3
        %v1372 = vsel %vm1299, %v1371, %v1370
        %v1373 = vrot.slane %v1268, 2
        %v1374 = vsel %vm1302, %v1373, %v1372
        %v1375 = vrot.slane %v1269, 1
        %v1376 = vsel %vm1305, %v1375, %v1374
        %v1377 = vrot.slane %v1271, 7
        %v1378 = vsel %vm1287, %v1377, %v1270
        %v1379 = vrot.slane %v1272, 6
        %v1380 = vsel %vm1290, %v1379, %v1378
        %v1381 = vrot.slane %v1273, 5
        %v1382 = vsel %vm1293, %v1381, %v1380
        %v1383 = vrot.slane %v1274, 4
        %v1384 = vsel %vm1296, %v1383, %v1382
        %v1385 = vrot.slane %v1275, 3
        %v1386 = vsel %vm1299, %v1385, %v1384
        %v1387 = vrot.slane %v1276, 2
        %v1388 = vsel %vm1302, %v1387, %v1386
        %v1389 = vrot.slane %v1277, 1
        %v1390 = vsel %vm1305, %v1389, %v1388
        %v1391 = vrot.slane %v1279, 7
        %v1392 = vsel %vm1287, %v1391, %v1278
        %v1393 = vrot.slane %v1280, 6
        %v1394 = vsel %vm1290, %v1393, %v1392
        %v1395 = vrot.slane %v1281, 5
        %v1396 = vsel %vm1293, %v1395, %v1394
        %v1397 = vrot.slane %v1282, 4
        %v1398 = vsel %vm1296, %v1397, %v1396
        %v1399 = vrot.slane %v1283, 3
        %v1400 = vsel %vm1299, %v1399, %v1398
        %v1401 = vrot.slane %v1284, 2
        %v1402 = vsel %vm1302, %v1401, %v1400
        %v1403 = vrot.slane %v1285, 1
        %v1404 = vsel %vm1305, %v1403, %v1402
        %v1405 = vpack.c.b16 %v1320, %v1306
        %v1406 = vpack.c.b16 %v1348, %v1334
        %v1407 = vpack.c.b16 %v1376, %v1362
        %v1408 = vpack.c.b16 %v1404, %v1390
        %vm1409 = vcmask 64512
        %v1411 = vsel %vm1409, %v1405, 0
        %v1414 = vsel %vm1409, %v1406, 0
        %v1417 = vsel %vm1409, %v1407, 0
        %v1420 = vsel %vm1409, %v1408, 0
        %vm1422 = vcmask 1043456
        %v1424 = vsel %vm1422, %v1157, 0
        %1426 = vmatprep.subr.bf16.mxu0 0
        %1427 = vmatpush1.bf16.msra.mxu0 %v1424
        %1428 = vmatprep.subr.bf16.mxu0 0
        %1429 = vmatpush1.bf16.msra.mxu0 0
        %1430 = vmatprep.subr.bf16.mxu0 0
        %1431 = vmatpush1.bf16.msra.mxu0 0
        %1432 = vmatprep.subr.bf16.mxu0 0
        %1433 = vmatpush1.bf16.msra.mxu0 0
        %1434 = vmatprep.subr.bf16.mxu0 0
        %1435 = vmatpush1.bf16.msra.mxu0 0
        %1436 = vmatprep.subr.bf16.mxu0 0
        %1437 = vmatpush1.bf16.msra.mxu0 0
        %1438 = vmatprep.subr.bf16.mxu0 0
        %1439 = vmatpush1.bf16.msra.mxu0 0
        %1440 = vmatprep.subr.bf16.mxu0 0
        %1441 = vmatpush1.bf16.msra.mxu0 0
        %1442 = vmatprep.subr.bf16.mxu0 0
        %1443 = vmatpush1.bf16.msra.mxu0 0
        %1444 = vmatprep.subr.bf16.mxu0 0
        %1445 = vmatpush1.bf16.msra.mxu0 0
        %1446 = vmatprep.subr.bf16.mxu0 0
        %1447 = vmatpush1.bf16.msra.mxu0 0
        %1448 = vmatprep.subr.bf16.mxu0 0
        %1449 = vmatpush1.bf16.msra.mxu0 0
        %1450 = vmatprep.subr.bf16.mxu0 0
        %1451 = vmatpush1.bf16.msra.mxu0 0
        %1452 = vmatprep.subr.bf16.mxu0 0
        %1453 = vmatpush1.bf16.msra.mxu0 0
        %1454 = vmatprep.subr.bf16.mxu0 0
        %1455 = vmatpush1.bf16.msra.mxu0 0
        %1456 = vmatprep.subr.bf16.mxu0 0
        %1457 = vmatpush1.bf16.msra.mxu0 0
        %1458 = vmatprep.mubr.bf16.mxu0 0
        %1459 = vmatmul.mubr.bf16.gmra.mrb[0].mxu0 %v1411
        %v1460 = vpop.f32.mrb[0].mxu0
        %v1461 = vadd.f32 0.0, %v1460
        %v1462 = vpop.f32.mrb[0].mxu0
        %v1463 = vpop.f32.mrb[0].mxu0
        %v1464 = vadd.f32 0.0, %v1463
        %v1465 = vpop.f32.mrb[0].mxu0
        %1466 = vmatprep.mubr.bf16.mxu0 0
        %1467 = vmatmul.mubr.bf16.gmra.mrb[0].mxu0 %v1414
        %v1468 = vpop.f32.mrb[0].mxu0
        %v1469 = vadd.f32 0.0, %v1468
        %v1470 = vpop.f32.mrb[0].mxu0
        %v1471 = vpop.f32.mrb[0].mxu0
        %v1472 = vadd.f32 0.0, %v1471
        %v1473 = vpop.f32.mrb[0].mxu0
        %1474 = vmatprep.mubr.bf16.mxu0 0
        %1475 = vmatmul.mubr.bf16.gmra.mrb[0].mxu0 %v1417
        %v1476 = vpop.f32.mrb[0].mxu0
        %v1477 = vadd.f32 0.0, %v1476
        %v1478 = vpop.f32.mrb[0].mxu0
        %v1479 = vpop.f32.mrb[0].mxu0
        %v1480 = vadd.f32 0.0, %v1479
        %v1481 = vpop.f32.mrb[0].mxu0
        %1482 = vmatprep.mubr.bf16.mxu0 0
        %1483 = vmatmul.mubr.bf16.gmra.mrb[0].mxu0 %v1420
        %v1484 = vpop.f32.mrb[0].mxu0
        %v1485 = vadd.f32 0.0, %v1484
        %v1486 = vpop.f32.mrb[0].mxu0
        %v1487 = vpop.f32.mrb[0].mxu0
        %v1488 = vadd.f32 0.0, %v1487
        %v1489 = vpop.f32.mrb[0].mxu0
        %1490 = vdwg.mxu0
        %1491 = vst [vmem:[%s217] sm:$0xff] %v1461
        %1492 = vst [vmem:[%s217 + $0x8] sm:$0xff] %v1464
        %1493 = vst [vmem:[%s217 + $0x10] sm:$0xff] %v1469
        %1494 = vst [vmem:[%s217 + $0x18] sm:$0xff] %v1472
        %1495 = vst [vmem:[%s217 + $0x20] sm:$0xff] %v1477
        %1496 = vst [vmem:[%s217 + $0x28] sm:$0xff] %v1480
        %1497 = vst [vmem:[%s217 + $0x30] sm:$0xff] %v1485
        %1498 = vst [vmem:[%s217 + $0x38] sm:$0xff] %v1488
        %s1499 = sand.u32 %s131, 1
        %s1500 = scalar_lea.sflag [#allocation3], %s1499
        %s1501 = sand.u32 %s131, 1
        %s1502 = smul.addr %s1501, 64
        %s1503 = scalar_lea.vmem [#allocation2], %s1502
        // Predicated region
        $region37: #{tpu_custom_call.1} parent=35 // pred_check
          %p1504 = pneg %p141
        $region38: #{tpu_custom_call.1} parent=35 // pred_check_branch
          %1506 = sbr.rel (%p1504) target = $region40
        $region39: #{tpu_custom_call.1} parent=35 // pred_region
          %s1507 = smul.u32 8, %s23
          %s1509 = ssub.s32 1024, 1024
          %1510 = vsyncadd %s1500, %s1509
          %s1511 = smul.addr %s22, 8
          %s1512 = sadd.s32 %s1507, %s1511
          %s1513 = smul.addr %s1512, 128
          %s1514 = scalar_lea.hbm %s4, %s1513
          %s1515 = sshll.u32 %s1503, 4
          %s1516 = int_to_ptr.vmem [resolvable:$true] %s1515
          %1521 = dma.vmem_to_hbm [thread:$0]  %s1516, 1024, %s1514, %s1500, 128, 128, 8
        $region40: #{tpu_custom_call.1} parent=35 // pred_fallthru
          _
      $region36: #{tpu_custom_call.1} parent=5 // pred_fallthru
        _
      %p1522 = scmp.le.s32.totalorder 2, %s13
      // Predicated region
      $region41: #{tpu_custom_call.1} parent=5 // pred_check
        %p1523 = pneg %p1522
      $region42: #{tpu_custom_call.1} parent=5 // pred_check_branch
        %1525 = sbr.rel (%p1523) target = $region44
      $region43: #{tpu_custom_call.1} parent=5 // pred_region
        %s1526 = ssub.s32 %s13, 2
        // Predicated region
        $region45: #{tpu_custom_call.1} parent=43 // pred_check
          %p1527 = pneg %p147
        $region46: #{tpu_custom_call.1} parent=43 // pred_check_branch
          %1529 = sbr.rel (%p1527) target = $region48
        $region47: #{tpu_custom_call.1} parent=43 // pred_region
          %s1530 = sand.u32 %s132, 1
          %s1531 = scalar_lea.sflag [#allocation3], %s1530
          %s1532 = sand.u32 %s132, 1
          %s1533 = smul.addr %s1532, 64
          %s1534 = scalar_lea.vmem [#allocation2], %s1533
          %1535 = dma.done %s1531, 1024
        $region48: #{tpu_custom_call.1} parent=43 // pred_fallthru
          _
      $region44: #{tpu_custom_call.1} parent=5 // pred_fallthru
        _
    $region6: #{tpu_custom_call.1} parent=1 // loop_footer
      %s17 = sadd.s32 1, %s13
    $region7: #{tpu_custom_call.1} parent=1 // loop_footer_branch
      %12 = sbr.rel target = $region3
    $region8: #{tpu_custom_call.1} parent=1 // loop_exit
      _
    %1536 = vsyncpa [#allocation3], 1
    %s1537 = scalar_lea.sflag [#allocation3], 1
    %1538 = vsyncpa %s1537, 1

</llo_original>
